<compile_context>
chip_gen: v6e
topology: v6e:2x2x1
jax: 0.10.0
libtpu: 0.0.40
codegen_flags: <defaults>
</compile_context>

<pallas_src>
import functools

import jax
import jax.numpy as jnp
from jax.experimental import pallas as pl
from jax.experimental.pallas import tpu as pltpu


def _round_up(x, m):
    return ((x + m - 1) // m) * m


def _fused_dsconv_kernel(a_ref, dw_ref, xc_ref, *rest, dilation, ks, rem,
                         mask_tail, n_kt, npk, has_halo):
    """Depthwise conv + PReLU + (gamma-folded) pointwise matmul + gLN partials.

    One (batch, time-split, time-tile) grid step.  Emits the pre-normalization
    pointwise output (tile, B) and accumulates per-(batch, split) sum / sumsq
    of the post-PReLU activations for the exact global layer norm.
    """
    if has_halo:
        xn_ref, w_ref, o_ref, acc_ref = rest
    else:
        w_ref, o_ref, acc_ref = rest

    s = pl.program_id(1)
    k = pl.program_id(2)

    @pl.when(k == 0)
    def _init():
        acc_ref[...] = jnp.zeros_like(acc_ref)

    tile = o_ref.shape[1]

    # Window = current tile (+ halo8 look-ahead rows).  x streams as bf16;
    # tap math / stats run in f32 (v5e has no bf16 VALU).
    xc = xc_ref[0].astype(jnp.float32)
    if has_halo:
        win = jnp.concatenate([xc, xn_ref[0].astype(jnp.float32)], axis=0)
    else:
        win = xc

    # depthwise conv: y[k, c] = sum_t w[t, c] * xpad[k + t*d, c]  (static taps)
    y = win[0:tile, :] * dw_ref[0:1, :]
    for t in range(1, ks):
        sh = t * dilation
        y = y + win[sh:sh + tile, :] * dw_ref[t:t + 1, :]

    # PReLU (single shared slope)
    a = a_ref[0]
    y = jnp.where(y >= 0, y, a * y)

    # pointwise 1x1 conv on the MXU; the gLN scale/shift is folded into the
    # wrapper epilogue (out = rstd * o + bias), so no second pass over y.
    o_ref[0] = jnp.dot(y.astype(w_ref.dtype), w_ref[...],
                       preferred_element_type=jnp.float32)

    def _accum(yv):
        acc_ref[0, 0, 0:1, :] += jnp.sum(yv, axis=0, keepdims=True)
        acc_ref[0, 0, 1:2, :] += jnp.sum(yv * yv, axis=0, keepdims=True)

    if mask_tail:
        # Only the last time tile pays for the tail mask (stats only; rows past
        # Kout of the matmul output are dropped in the wrapper).
        is_last = (s * npk + k) == (n_kt - 1)

        @pl.when(is_last)
        def _masked():
            row = jax.lax.broadcasted_iota(jnp.int32, (tile, 1), 0)
            _accum(jnp.where(row < rem, y, 0.0))

        @pl.when(jnp.logical_not(is_last))
        def _plain():
            _accum(y)
    else:
        _accum(y)


def depthwise_separable_conv_nlc(x_nlc, dw_w, prelu_a, gamma, beta, pw_w, *,
                                 kernel_size, padding, dilation,
                                 time_tile=1024, matmul_dtype=jnp.bfloat16,
                                 x_dtype=jnp.bfloat16):
    """Channels-last core.  x_nlc: (M, K, C) -> (M, Kout, B) f32.

    Kout = K + 2*padding - dilation*(kernel_size-1).
    dw_w: (C, ks); prelu_a: (1,); gamma/beta: (1, C) or (C,); pw_w: (B, C).
    """
    # TODO(synk): stride > 1, causal (Chomp1d) and cLN/BatchNorm variants not
    # implemented; ConvTasNet's default config is stride=1, non-causal, gLN.
    M, K, C = x_nlc.shape
    B = pw_w.shape[0]
    assert dw_w.shape == (C, kernel_size)
    halo = dilation * (kernel_size - 1)
    Kout = K + 2 * padding - halo
    assert Kout > 0
    halo8 = _round_up(halo, 8) if halo > 0 else 0

    # Time tile: multiple of 8 and of halo8 (so the halo BlockSpec block index
    # ((kt+1)*tile)//halo8 is exact).  Large tiles amortize the ~0.35us per
    # grid-step overhead; 1024 fits v5e/v6e (128 MiB VMEM) and v7x (64 MiB)
    # comfortably at C=512 now that the halo block is only halo8 rows.
    tile = min(_round_up(time_tile, 8), _round_up(Kout, 8))
    if halo8:
        tile = _round_up(max(tile, halo8), halo8)
    n_kt = -(-Kout // tile)
    kp = n_kt * tile                       # padded output length
    lx = kp + halo8                        # padded input length (halo look-ahead)

    # 2-way time split (extra 'parallel' grid axis) keeps both v7x TensorCores
    # busy at small batch; measured-neutral on single-TC v5e/v6e.
    splits = 2 if n_kt % 2 == 0 else 1
    npk = n_kt // splits

    # Layout plumbing (one relayout pass; conv zero padding rides along).
    xp = jnp.pad(x_nlc.astype(x_dtype),
                 ((0, 0), (padding, lx - K - padding), (0, 0)))
    dw_t = jnp.transpose(dw_w, (1, 0)).astype(jnp.float32)            # (ks, C)
    a = prelu_a.reshape(-1)[:1].astype(jnp.float32)
    g = gamma.reshape(C).astype(jnp.float32)
    bt = beta.reshape(C).astype(jnp.float32)
    wg = pw_w.astype(jnp.float32) * g[None, :]                        # (B, C)
    w_mx = jnp.transpose(wg).astype(matmul_dtype)                     # (C, B)

    # Scoped-VMEM limit from the actual per-step working set (double-buffered
    # streams + elementwise temporaries), clamped under v7x's 64 MiB physical.
    xb = jnp.dtype(x_dtype).itemsize
    per_step = (tile * C * xb + halo8 * C * xb + tile * B * 4
                + 8 * C * 4 + kernel_size * C * 4 + C * B * 2)
    temps = 8 * tile * max(C, B) * 4
    vmem_limit = int(min(56 << 20, max(40 << 20, 2 * per_step + temps + (4 << 20))))

    kern = functools.partial(
        _fused_dsconv_kernel, dilation=dilation, ks=kernel_size,
        rem=Kout - (n_kt - 1) * tile, mask_tail=(kp != Kout),
        n_kt=n_kt, npk=npk, has_halo=(halo8 > 0))

    in_specs = [
        pl.BlockSpec(memory_space=pltpu.MemorySpace.SMEM),            # PReLU slope
        pl.BlockSpec((kernel_size, C), lambda m, s, k: (0, 0)),       # dw weights
        pl.BlockSpec((1, tile, C), lambda m, s, k: (m, s * npk + k, 0)),  # x tile
    ]
    args = [a, dw_t, xp]
    if halo8:
        hb = tile // halo8
        in_specs.append(
            pl.BlockSpec((1, halo8, C),
                         lambda m, s, k: (m, (s * npk + k + 1) * hb, 0)))  # halo rows
        args.append(xp)
    in_specs.append(pl.BlockSpec((C, B), lambda m, s, k: (0, 0)))     # gamma-folded pw
    args.append(w_mx)

    out_pre, acc = pl.pallas_call(
        kern,
        out_shape=(jax.ShapeDtypeStruct((M, kp, B), jnp.float32),
                   jax.ShapeDtypeStruct((M, splits, 8, C), jnp.float32)),
        grid=(M, splits, npk),
        in_specs=in_specs,
        out_specs=(pl.BlockSpec((1, tile, B), lambda m, s, k: (m, s * npk + k, 0)),
                   pl.BlockSpec((1, 1, 8, C), lambda m, s, k: (m, s, 0, 0))),
        compiler_params=pltpu.CompilerParams(
            dimension_semantics=("parallel", "parallel", "arbitrary"),
            vmem_limit_bytes=vmem_limit),
    )(*args)

    # ---- tiny XLA glue: exact gLN stats + per-batch affine epilogue (fused by
    # XLA with the Kout slice and any following layout transpose) ----
    n_el = float(C * Kout)
    mean = jnp.sum(acc[:, :, 0, :], axis=(1, 2)) / n_el               # (M,)
    var = jnp.maximum(jnp.sum(acc[:, :, 1, :], axis=(1, 2)) / n_el - mean * mean, 0.0)
    rstd = jax.lax.rsqrt(var + 1e-7)                                  # (M,)

    bias = (pw_w.astype(jnp.float32) @ bt)[None, :] \
        - (rstd * mean)[:, None] * jnp.sum(wg, axis=1)[None, :]       # (M, B)

    return rstd[:, None, None] * out_pre[:, :Kout, :] + bias[:, None, :]


def depthwise_separable_conv(x, dw_w, prelu_a, gamma, beta, pw_w, *,
                             kernel_size, padding, dilation,
                             time_tile=1024, matmul_dtype=jnp.bfloat16,
                             x_dtype=jnp.bfloat16):
    """PyTorch-module-shaped entry point: x (M, C, K) -> (M, B, Kout).

    In a full TCN stack prefer depthwise_separable_conv_nlc and keep the
    activations channels-last between blocks so these two transposes vanish.
    """
    out_nlc = depthwise_separable_conv_nlc(
        jnp.transpose(x, (0, 2, 1)), dw_w, prelu_a, gamma, beta, pw_w,
        kernel_size=kernel_size, padding=padding, dilation=dilation,
        time_tile=time_tile, matmul_dtype=matmul_dtype, x_dtype=x_dtype)
    return jnp.transpose(out_nlc, (0, 2, 1))


def _reference(x, dw_w, prelu_a, gamma, beta, pw_w, *, padding, dilation):
    """Independent pure-JAX reference (lax.conv) mirroring the PyTorch module."""
    C = x.shape[1]
    y = jax.lax.conv_general_dilated(
        x, dw_w[:, None, :],                     # (C, 1, ks) == OIW, grouped
        window_strides=(1,), padding=[(padding, padding)],
        rhs_dilation=(dilation,),
        dimension_numbers=("NCH", "OIH", "NCH"),
        feature_group_count=C)
    a = prelu_a[0]
    y = jnp.where(y >= 0, y, a * y)
    mean = jnp.mean(y, axis=(1, 2), keepdims=True)
    var = jnp.mean((y - mean) ** 2, axis=(1, 2), keepdims=True)
    y = gamma.reshape(1, C, 1) * (y - mean) / jnp.sqrt(var + 1e-7) + beta.reshape(1, C, 1)
    return jnp.einsum("bc,mck->mbk", pw_w, y)


if __name__ == "__main__":
    def run_case(M, H, Bo, K, ks, dilation, time_tile, keys):
        padding = (ks - 1) * dilation // 2       # "same" output length
        kx, kdw, kpw, kg, kb = keys
        x = jax.random.normal(kx, (M, H, K), jnp.float32)
        dw_w = jax.random.normal(kdw, (H, ks), jnp.float32) * 0.3   # (H,1,ks) squeezed
        pw_w = jax.random.normal(kpw, (Bo, H), jnp.float32) * 0.3   # (Bo,H,1) squeezed
        prelu_a = jnp.array([0.25], jnp.float32)                    # PReLU default
        gamma = 1.0 + 0.1 * jax.random.normal(kg, (1, H), jnp.float32)
        beta = 0.1 * jax.random.normal(kb, (1, H), jnp.float32)

        out = depthwise_separable_conv(
            x, dw_w, prelu_a, gamma, beta, pw_w,
            kernel_size=ks, padding=padding, dilation=dilation, time_tile=time_tile)
        out = jax.block_until_ready(out)

        ref = _reference(x, dw_w, prelu_a, gamma, beta, pw_w,
                         padding=padding, dilation=dilation)
        Kout = K + 2 * padding - dilation * (ks - 1)
        assert out.shape == ref.shape == (M, Bo, Kout), (out.shape, ref.shape)
        rel = float(jnp.sqrt(jnp.sum((out - ref) ** 2) / (jnp.sum(ref ** 2) + 1e-12)))
        assert rel < 3e-2, rel                  # bf16 x stream + bf16 MXU operands
        return rel

    keys = jax.random.split(jax.random.PRNGKey(0), 20)
    # (a) 3 time tiles (odd -> no time split): halo path + tail-masked stats.
    run_case(2, 4, 6, 18, 3, 2, 8, keys[0:5])
    # (b) 4 time tiles -> 2-way 'parallel' time split + halo + tail mask.
    run_case(2, 4, 6, 30, 3, 2, 8, keys[5:10])
    # (c) kernel_size=1 (no halo input at all) with a 2-way time split.
    run_case(2, 4, 6, 16, 1, 1, 8, keys[10:15])
    # (d) single large tile (default tiling path), batch=1, tail mask.
    run_case(1, 4, 6, 18, 3, 2, 1024, keys[15:20])
    print("KERNEL_OK")
</pallas_src>

<mosaic_0001>
module attributes {stable_mosaic.version = 11 : i64} {
  func.func @_fused_dsconv_kernel(%arg0: i32, %arg1: i32, %arg2: i32, %arg3: memref<1xf32, #tpu.memory_space<smem>>, %arg4: memref<3x4xf32, #tpu.memory_space<vmem>>, %arg5: memref<1x8x4xbf16, #tpu.memory_space<vmem>>, %arg6: memref<1x8x4xbf16, #tpu.memory_space<vmem>>, %arg7: memref<4x6xbf16, #tpu.memory_space<vmem>>, %arg8: memref<1x8x6xf32, #tpu.memory_space<vmem>>, %arg9: memref<1x1x8x4xf32, #tpu.memory_space<vmem>>) attributes {dimension_semantics = [#tpu.dimension_semantics<parallel>, #tpu.dimension_semantics<parallel>, #tpu.dimension_semantics<arbitrary>], iteration_bounds = array<i64: 2, 1, 3>, scalar_prefetch = 0 : i64, scratch_operands = 0 : i64, tpu.core_type = #tpu.core_type<tc>, window_params = [{transform_indices = @transform_0, window_bounds = array<i64: 1>}, {pipeline_mode = #tpu.pipeline_mode<synchronous>, transform_indices = @transform_1, window_bounds = array<i64: 3, 4>}, {transform_indices = @transform_2, window_bounds = array<i64: 1, 8, 4>}, {transform_indices = @transform_3, window_bounds = array<i64: 1, 8, 4>}, {pipeline_mode = #tpu.pipeline_mode<synchronous>, transform_indices = @transform_4, window_bounds = array<i64: 4, 6>}, {transform_indices = @transform_5, window_bounds = array<i64: 1, 8, 6>}, {transform_indices = @transform_6, window_bounds = array<i64: 1, 1, 8, 4>}]} {
    %c0_i32 = arith.constant 0 : i32
    %0 = arith.cmpi eq, %arg2, %c0_i32 : i32
    %1 = arith.extui %0 : i1 to i32
    %c0_i32_0 = arith.constant 0 : i32
    %2 = arith.cmpi ne, %1, %c0_i32_0 : i32
    scf.if %2 {
      %cst_19 = arith.constant 0.000000e+00 : f32
      %44 = vector.broadcast %cst_19 : f32 to vector<1x1x8x4xf32>
      %c0_20 = arith.constant 0 : index
      %c0_21 = arith.constant 0 : index
      %c0_22 = arith.constant 0 : index
      %c0_23 = arith.constant 0 : index
      %45 = vector.load %arg9[%c0_20, %c0_21, %c0_22, %c0_23] : memref<1x1x8x4xf32, #tpu.memory_space<vmem>>, vector<1x1x8x4xf32>
      tpu.vector_store %arg9[%c0_20, %c0_21, %c0_22, %c0_23], %44 {strides = array<i32>} : memref<1x1x8x4xf32, #tpu.memory_space<vmem>>, vector<1x1x8x4xf32>,
    } else {
    }
    %c0 = arith.constant 0 : index
    %c0_1 = arith.constant 0 : index
    %c0_2 = arith.constant 0 : index
    %3 = vector.load %arg5[%c0, %c0_1, %c0_2] : memref<1x8x4xbf16, #tpu.memory_space<vmem>>, vector<1x8x4xbf16>
    %4 = vector.shape_cast %3 : vector<1x8x4xbf16> to vector<8x4xbf16>
    %5 = arith.extf %4 : vector<8x4xbf16> to vector<8x4xf32>
    %c0_3 = arith.constant 0 : index
    %c0_4 = arith.constant 0 : index
    %c0_5 = arith.constant 0 : index
    %6 = vector.load %arg6[%c0_3, %c0_4, %c0_5] : memref<1x8x4xbf16, #tpu.memory_space<vmem>>, vector<1x8x4xbf16>
    %7 = vector.shape_cast %6 : vector<1x8x4xbf16> to vector<8x4xbf16>
    %8 = arith.extf %7 : vector<8x4xbf16> to vector<8x4xf32>
    %9 = tpu.concatenate %5, %8 in 0 : vector<8x4xf32>, vector<8x4xf32> -> vector<16x4xf32>
    %10 = vector.extract_strided_slice %9 {offsets = [0, 0], sizes = [8, 4], strides = [1, 1]} : vector<16x4xf32> to vector<8x4xf32>
    %c0_6 = arith.constant 0 : index
    %c0_7 = arith.constant 0 : index
    %11 = vector.load %arg4[%c0_6, %c0_7] : memref<3x4xf32, #tpu.memory_space<vmem>>, vector<1x4xf32>
    %12 = vector.broadcast %11 : vector<1x4xf32> to vector<8x4xf32>
    %13 = arith.mulf %10, %12 : vector<8x4xf32>
    %14 = vector.extract_strided_slice %9 {offsets = [2, 0], sizes = [8, 4], strides = [1, 1]} : vector<16x4xf32> to vector<8x4xf32>
    %c1 = arith.constant 1 : index
    %c0_8 = arith.constant 0 : index
    %15 = vector.load %arg4[%c1, %c0_8] : memref<3x4xf32, #tpu.memory_space<vmem>>, vector<1x4xf32>
    %16 = vector.broadcast %15 : vector<1x4xf32> to vector<8x4xf32>
    %17 = arith.mulf %14, %16 : vector<8x4xf32>
    %18 = arith.addf %13, %17 : vector<8x4xf32>
    %19 = vector.extract_strided_slice %9 {offsets = [4, 0], sizes = [8, 4], strides = [1, 1]} : vector<16x4xf32> to vector<8x4xf32>
    %c2 = arith.constant 2 : index
    %c0_9 = arith.constant 0 : index
    %20 = vector.load %arg4[%c2, %c0_9] : memref<3x4xf32, #tpu.memory_space<vmem>>, vector<1x4xf32>
    %21 = vector.broadcast %20 : vector<1x4xf32> to vector<8x4xf32>
    %22 = arith.mulf %19, %21 : vector<8x4xf32>
    %23 = arith.addf %18, %22 : vector<8x4xf32>
    %c0_10 = arith.constant 0 : index
    %24 = memref.load %arg3[%c0_10] : memref<1xf32, #tpu.memory_space<smem>>
    %cst = arith.constant 0.000000e+00 : f32
    %25 = vector.broadcast %cst : f32 to vector<8x4xf32>
    %26 = arith.cmpf oge, %23, %25 : vector<8x4xf32>
    %27 = vector.broadcast %24 : f32 to vector<8x4xf32>
    %28 = arith.mulf %27, %23 : vector<8x4xf32>
    %29 = arith.select %26, %23, %28 : vector<8x4xi1>, vector<8x4xf32>
    %30 = arith.truncf %29 : vector<8x4xf32> to vector<8x4xbf16>
    %c0_11 = arith.constant 0 : index
    %c0_12 = arith.constant 0 : index
    %31 = vector.load %arg7[%c0_11, %c0_12] : memref<4x6xbf16, #tpu.memory_space<vmem>>, vector<4x6xbf16>
    %cst_13 = arith.constant dense<0.000000e+00> : vector<8x6xf32>
    %32 = tpu.matmul %30, %31, %cst_13 {dimension_numbers = #tpu.dot_dimension_numbers<[1], [0], [0], [1], [0, 0, 1, 1], [], []>} : vector<8x4xbf16>, vector<4x6xbf16>, vector<8x6xf32> -> vector<8x6xf32>
    %c0_14 = arith.constant 0 : index
    %c0_15 = arith.constant 0 : index
    %c0_16 = arith.constant 0 : index
    %33 = vector.load %arg8[%c0_14, %c0_15, %c0_16] : memref<1x8x6xf32, #tpu.memory_space<vmem>>, vector<1x8x6xf32>
    %34 = vector.shape_cast %33 : vector<1x8x6xf32> to vector<8x6xf32>
    %35 = vector.shape_cast %32 : vector<8x6xf32> to vector<1x8x6xf32>
    tpu.vector_store %arg8[%c0_14, %c0_15, %c0_16], %35 {strides = array<i32>} : memref<1x8x6xf32, #tpu.memory_space<vmem>>, vector<1x8x6xf32>,
    %c3_i32 = arith.constant 3 : i32
    %36 = arith.muli %arg1, %c3_i32 : i32
    %37 = arith.addi %36, %arg2 : i32
    %c2_i32 = arith.constant 2 : i32
    %38 = arith.cmpi eq, %37, %c2_i32 : i32
    %39 = arith.extui %38 : i1 to i32
    %c0_i32_17 = arith.constant 0 : i32
    %40 = arith.cmpi ne, %39, %c0_i32_17 : i32
    scf.if %40 {
      %44 = tpu.iota {dimensions = array<i32: 0>} : vector<8x1xi32>
      %c2_i32_19 = arith.constant 2 : i32
      %45 = vector.broadcast %c2_i32_19 : i32 to vector<8x1xi32>
      %46 = arith.cmpi slt, %44, %45 : vector<8x1xi32>
      %cst_20 = arith.constant 0.000000e+00 : f32
      %47 = vector.shape_cast %46 : vector<8x1xi1> to vector<8x1xi1>
      %48 = vector.broadcast %47 : vector<8x1xi1> to vector<8x4xi1>
      %49 = vector.broadcast %cst_20 : f32 to vector<8x4xf32>
      %50 = arith.select %48, %29, %49 : vector<8x4xi1>, vector<8x4xf32>
      %c0_21 = arith.constant 0 : index
      %c0_22 = arith.constant 0 : index
      %c0_23 = arith.constant 0 : index
      %c0_24 = arith.constant 0 : index
      %51 = vector.load %arg9[%c0_21, %c0_22, %c0_23, %c0_24] : memref<1x1x8x4xf32, #tpu.memory_space<vmem>>, vector<1x1x1x4xf32>
      %52 = vector.shape_cast %51 : vector<1x1x1x4xf32> to vector<1x4xf32>
      %cst_25 = arith.constant dense<0.000000e+00> : vector<4xf32>
      %53 = vector.multi_reduction <add>, %50, %cst_25 [0] : vector<8x4xf32> to vector<4xf32>
      %54 = vector.shape_cast %53 : vector<4xf32> to vector<1x4xf32>
      %55 = arith.addf %52, %54 : vector<1x4xf32>
      %c0_26 = arith.constant 0 : index
      %c0_27 = arith.constant 0 : index
      %c0_28 = arith.constant 0 : index
      %c0_29 = arith.constant 0 : index
      %56 = vector.load %arg9[%c0_26, %c0_27, %c0_28, %c0_29] : memref<1x1x8x4xf32, #tpu.memory_space<vmem>>, vector<1x1x1x4xf32>
      %57 = vector.shape_cast %56 : vector<1x1x1x4xf32> to vector<1x4xf32>
      %58 = vector.shape_cast %55 : vector<1x4xf32> to vector<1x1x1x4xf32>
      tpu.vector_store %arg9[%c0_26, %c0_27, %c0_28, %c0_29], %58 {strides = array<i32>} : memref<1x1x8x4xf32, #tpu.memory_space<vmem>>, vector<1x1x1x4xf32>,
      %c0_30 = arith.constant 0 : index
      %c0_31 = arith.constant 0 : index
      %c1_32 = arith.constant 1 : index
      %c0_33 = arith.constant 0 : index
      %59 = vector.load %arg9[%c0_30, %c0_31, %c1_32, %c0_33] : memref<1x1x8x4xf32, #tpu.memory_space<vmem>>, vector<1x1x1x4xf32>
      %60 = vector.shape_cast %59 : vector<1x1x1x4xf32> to vector<1x4xf32>
      %61 = arith.mulf %50, %50 : vector<8x4xf32>
      %cst_34 = arith.constant dense<0.000000e+00> : vector<4xf32>
      %62 = vector.multi_reduction <add>, %61, %cst_34 [0] : vector<8x4xf32> to vector<4xf32>
      %63 = vector.shape_cast %62 : vector<4xf32> to vector<1x4xf32>
      %64 = arith.addf %60, %63 : vector<1x4xf32>
      %c0_35 = arith.constant 0 : index
      %c0_36 = arith.constant 0 : index
      %c1_37 = arith.constant 1 : index
      %c0_38 = arith.constant 0 : index
      %65 = vector.load %arg9[%c0_35, %c0_36, %c1_37, %c0_38] : memref<1x1x8x4xf32, #tpu.memory_space<vmem>>, vector<1x1x1x4xf32>
      %66 = vector.shape_cast %65 : vector<1x1x1x4xf32> to vector<1x4xf32>
      %67 = vector.shape_cast %64 : vector<1x4xf32> to vector<1x1x1x4xf32>
      tpu.vector_store %arg9[%c0_35, %c0_36, %c1_37, %c0_38], %67 {strides = array<i32>} : memref<1x1x8x4xf32, #tpu.memory_space<vmem>>, vector<1x1x1x4xf32>,
    } else {
    }
    %true = arith.constant true
    %41 = arith.xori %38, %true : i1
    %42 = arith.extui %41 : i1 to i32
    %c0_i32_18 = arith.constant 0 : i32
    %43 = arith.cmpi ne, %42, %c0_i32_18 : i32
    scf.if %43 {
      %c0_19 = arith.constant 0 : index
      %c0_20 = arith.constant 0 : index
      %c0_21 = arith.constant 0 : index
      %c0_22 = arith.constant 0 : index
      %44 = vector.load %arg9[%c0_19, %c0_20, %c0_21, %c0_22] : memref<1x1x8x4xf32, #tpu.memory_space<vmem>>, vector<1x1x1x4xf32>
      %45 = vector.shape_cast %44 : vector<1x1x1x4xf32> to vector<1x4xf32>
      %cst_23 = arith.constant dense<0.000000e+00> : vector<4xf32>
      %46 = vector.multi_reduction <add>, %29, %cst_23 [0] : vector<8x4xf32> to vector<4xf32>
      %47 = vector.shape_cast %46 : vector<4xf32> to vector<1x4xf32>
      %48 = arith.addf %45, %47 : vector<1x4xf32>
      %c0_24 = arith.constant 0 : index
      %c0_25 = arith.constant 0 : index
      %c0_26 = arith.constant 0 : index
      %c0_27 = arith.constant 0 : index
      %49 = vector.load %arg9[%c0_24, %c0_25, %c0_26, %c0_27] : memref<1x1x8x4xf32, #tpu.memory_space<vmem>>, vector<1x1x1x4xf32>
      %50 = vector.shape_cast %49 : vector<1x1x1x4xf32> to vector<1x4xf32>
      %51 = vector.shape_cast %48 : vector<1x4xf32> to vector<1x1x1x4xf32>
      tpu.vector_store %arg9[%c0_24, %c0_25, %c0_26, %c0_27], %51 {strides = array<i32>} : memref<1x1x8x4xf32, #tpu.memory_space<vmem>>, vector<1x1x1x4xf32>,
      %c0_28 = arith.constant 0 : index
      %c0_29 = arith.constant 0 : index
      %c1_30 = arith.constant 1 : index
      %c0_31 = arith.constant 0 : index
      %52 = vector.load %arg9[%c0_28, %c0_29, %c1_30, %c0_31] : memref<1x1x8x4xf32, #tpu.memory_space<vmem>>, vector<1x1x1x4xf32>
      %53 = vector.shape_cast %52 : vector<1x1x1x4xf32> to vector<1x4xf32>
      %54 = arith.mulf %29, %29 : vector<8x4xf32>
      %cst_32 = arith.constant dense<0.000000e+00> : vector<4xf32>
      %55 = vector.multi_reduction <add>, %54, %cst_32 [0] : vector<8x4xf32> to vector<4xf32>
      %56 = vector.shape_cast %55 : vector<4xf32> to vector<1x4xf32>
      %57 = arith.addf %53, %56 : vector<1x4xf32>
      %c0_33 = arith.constant 0 : index
      %c0_34 = arith.constant 0 : index
      %c1_35 = arith.constant 1 : index
      %c0_36 = arith.constant 0 : index
      %58 = vector.load %arg9[%c0_33, %c0_34, %c1_35, %c0_36] : memref<1x1x8x4xf32, #tpu.memory_space<vmem>>, vector<1x1x1x4xf32>
      %59 = vector.shape_cast %58 : vector<1x1x1x4xf32> to vector<1x4xf32>
      %60 = vector.shape_cast %57 : vector<1x4xf32> to vector<1x1x1x4xf32>
      tpu.vector_store %arg9[%c0_33, %c0_34, %c1_35, %c0_36], %60 {strides = array<i32>} : memref<1x1x8x4xf32, #tpu.memory_space<vmem>>, vector<1x1x1x4xf32>,
    } else {
    }
    return
  }
  func.func @transform_0(%arg0: i32, %arg1: i32, %arg2: i32) -> i32 {
    %c0_i32 = arith.constant 0 : i32
    %c0_i32_0 = arith.constant 0 : i32
    return %c0_i32 : i32
  }
  func.func @transform_1(%arg0: i32, %arg1: i32, %arg2: i32) -> (i32, i32) {
    %c0_i32 = arith.constant 0 : i32
    %c0_i32_0 = arith.constant 0 : i32
    %c0_i32_1 = arith.constant 0 : i32
    return %c0_i32, %c0_i32_0 : i32, i32
  }
  func.func @transform_2(%arg0: i32, %arg1: i32, %arg2: i32) -> (i32, i32, i32) {
    %c3_i32 = arith.constant 3 : i32
    %0 = arith.muli %arg1, %c3_i32 : i32
    %1 = arith.addi %0, %arg2 : i32
    %c0_i32 = arith.constant 0 : i32
    %c0_i32_0 = arith.constant 0 : i32
    return %arg0, %1, %c0_i32 : i32, i32, i32
  }
  func.func @transform_3(%arg0: i32, %arg1: i32, %arg2: i32) -> (i32, i32, i32) {
    %c3_i32 = arith.constant 3 : i32
    %0 = arith.muli %arg1, %c3_i32 : i32
    %1 = arith.addi %0, %arg2 : i32
    %c1_i32 = arith.constant 1 : i32
    %2 = arith.addi %1, %c1_i32 : i32
    %c1_i32_0 = arith.constant 1 : i32
    %3 = arith.muli %2, %c1_i32_0 : i32
    %c0_i32 = arith.constant 0 : i32
    %c0_i32_1 = arith.constant 0 : i32
    return %arg0, %3, %c0_i32 : i32, i32, i32
  }
  func.func @transform_4(%arg0: i32, %arg1: i32, %arg2: i32) -> (i32, i32) {
    %c0_i32 = arith.constant 0 : i32
    %c0_i32_0 = arith.constant 0 : i32
    %c0_i32_1 = arith.constant 0 : i32
    return %c0_i32, %c0_i32_0 : i32, i32
  }
  func.func @transform_5(%arg0: i32, %arg1: i32, %arg2: i32) -> (i32, i32, i32) {
    %c3_i32 = arith.constant 3 : i32
    %0 = arith.muli %arg1, %c3_i32 : i32
    %1 = arith.addi %0, %arg2 : i32
    %c0_i32 = arith.constant 0 : i32
    %c0_i32_0 = arith.constant 0 : i32
    return %arg0, %1, %c0_i32 : i32, i32, i32
  }
  func.func @transform_6(%arg0: i32, %arg1: i32, %arg2: i32) -> (i32, i32, i32, i32) {
    %c0_i32 = arith.constant 0 : i32
    %c0_i32_0 = arith.constant 0 : i32
    %c0_i32_1 = arith.constant 0 : i32
    return %arg0, %arg1, %c0_i32, %c0_i32_0 : i32, i32, i32, i32
  }
}

</mosaic_0001>

<llo_original>
// kernel: tpu_custom_call.1
$region0: #{tpu_custom_call.1}
  #allocation0 [shape = 'u32[]', space=smem, size = 0x4, offset = 0x4, fixed_abs, tag = 'smem constant byte address 0x4 - core index']
  #allocation1 [shape = 'u32[144,128]{1,0:T(1,128)}', space=vmem, size = 0x12000, scoped, tag = 'internal scratch']
  #allocation2 [shape = 'f32[1]{0:T(128)S(6)}', space=smem, size = 0x200, scoped, tag = 'scoped memory for tpu_custom_call.1']
  %s0 = inlined_call_operand.<no memory space> [shape: f32[1], index: 0, kind: input, shape index: {}]
  %s1 = inlined_call_operand.vmem [shape: f32[3,4], index: 1, kind: input, shape index: {}]
  %s2 = inlined_call_operand.vmem [shape: bf16[2,32,4], index: 2, kind: input, shape index: {}]
  %s3 = inlined_call_operand.vmem [shape: bf16[2,32,4], index: 3, kind: input, shape index: {}]
  %s4 = inlined_call_operand.vmem [shape: bf16[4,6], index: 4, kind: input, shape index: {}]
  %s5 = inlined_call_operand.vmem [shape: f32[2,24,6], index: 5, kind: output, shape index: {0}]
  %s6 = inlined_call_operand.vmem [shape: f32[2,1,8,4], index: 6, kind: output, shape index: {1}]
  %7 = xla_tuple %s5, %s6
  %s8 = sld [smem:[#allocation0]]
  $region73: #{tpu_custom_call.1} parent=0
    _
  %s10 = ssub.s32 1, %s8
  %s11 = scalar_select 0, %s10, %s8
  %12 = sst [smem:[#allocation2]] %s0
  loop: start=0, step=1, limit=8
  $region2: #{tpu_custom_call.1} parent=0 // loop_pre_header
    _
  $region3: #{tpu_custom_call.1} parent=0 // loop_header
    %s14 = sphi 0, %s18
    %p15 = scmp.ge.s32.totalorder %s14, 8
    %s21 = sphi 0, %s40
    %s22 = sphi 0, %s36
    %s23 = sphi 0, %s32
    %s24 = sphi 0, %s21
    %s25 = sphi 0, %s22
    %s26 = sphi 0, %s23
    %s27 = sphi 0, %s24
    %s28 = sphi 0, %s25
    %s29 = sphi 0, %s26
    %s41 = sphi 0, %s41
    %s43 = sphi 0, %s41
    %s44 = sphi 0, %s43
    %s58 = sphi 0, %s44
    %s62 = sphi 0, %s62
    %s64 = sphi 0, %s62
    %s65 = sphi 0, %s64
    %s79 = sphi 0, %s65
    %s91 = sphi 0, %s93
    %s94 = sphi 0, %s91
    %s95 = sphi 0, %s94
    %s111 = sphi 0, %s95
    %s125 = sphi 0, %s127
    %s128 = sphi 0, %s125
    %s129 = sphi 0, %s128
    %s145 = sphi 0, %s129
    %s149 = sphi 0, %s149
    %s151 = sphi 0, %s149
    %s152 = sphi 0, %s151
    %s166 = sphi 0, %s152
    %s178 = sphi 0, %s180
    %s181 = sphi 0, %s178
    %s182 = sphi 0, %s181
    %s198 = sphi 0, %s182
    %s206 = sphi 0, %s208
    %s209 = sphi 0, %s206
    %s210 = sphi 0, %s209
    %s226 = sphi 0, %s210
  $region4: #{tpu_custom_call.1} parent=0 // loop_header_branch
    %17 = sbr.rel (%p15) target = $region8
  $region5: #{tpu_custom_call.1} parent=0 // loop_body
    %s19 = ssub.s32 %s14, 1
    %s20 = ssub.s32 %s14, 2
    %s30 = sadd.s32 1, %s23
    %p31 = scmp.ge.s32.totalorder %s30, 3
    %s32 = scalar_select %p31, 0, %s30
    %s33 = sadd.s32 1, %s22
    %s34 = scalar_select %p31, %s33, %s22
    %p35 = scmp.ge.s32.totalorder %s34, 1
    %s36 = scalar_select %p35, 0, %s34
    %s37 = sadd.s32 1, %s21
    %s38 = scalar_select %p35, %s37, %s21
    %p39 = scmp.ge.s32.totalorder %s38, 2
    %s40 = scalar_select %p39, 0, %s38
    %s42 = sadd.s32 %s41, 1
    %p45 = scmp.eq.s32.totalorder %s14, 5
    %p46 = scmp.ne.s32.totalorder %s41, %s43
    %p47 = scmp.eq.s32.totalorder %s14, 0
    %p48 = por %p46, %p47
    %p49 = scmp.ne.s32.totalorder %s41, %s43
    %p50 = scmp.eq.s32.totalorder %s19, 5
    %p51 = por %p49, %p50
    %p52 = scmp.ne.s32.totalorder %s43, %s44
    %p53 = scmp.eq.s32.totalorder %s19, 0
    %p54 = por %p52, %p53
    %p55 = scmp.ne.s32.totalorder %s43, %s44
    %p56 = scmp.eq.s32.totalorder %s20, 5
    %p57 = por %p55, %p56
    %p59 = scmp.ne.s32.totalorder %s44, %s58
    %p60 = scmp.eq.s32.totalorder %s20, 0
    %p61 = por %p59, %p60
    %s63 = sadd.s32 %s62, 1
    %p66 = scmp.eq.s32.totalorder %s14, 5
    %p67 = scmp.ne.s32.totalorder %s62, %s64
    %p68 = scmp.eq.s32.totalorder %s14, 0
    %p69 = por %p67, %p68
    %p70 = scmp.ne.s32.totalorder %s62, %s64
    %p71 = scmp.eq.s32.totalorder %s19, 5
    %p72 = por %p70, %p71
    %p73 = scmp.ne.s32.totalorder %s64, %s65
    %p74 = scmp.eq.s32.totalorder %s19, 0
    %p75 = por %p73, %p74
    %p76 = scmp.ne.s32.totalorder %s64, %s65
    %p77 = scmp.eq.s32.totalorder %s20, 5
    %p78 = por %p76, %p77
    %p80 = scmp.ne.s32.totalorder %s65, %s79
    %p81 = scmp.eq.s32.totalorder %s20, 0
    %p82 = por %p80, %p81
    %s83 = smul.u32 %s22, 3
    %s84 = sadd.s32 %s83, %s23
    %s85 = smul.u32 %s36, 3
    %s86 = sadd.s32 %s85, %s32
    %s87 = ssub.s32 %s21, %s40
    %s88 = ssub.s32 %s84, %s86
    %s89 = sor.u32 %s87, %s88
    %p90 = scmp.eq.s32.totalorder %s89, 0
    %s92 = sadd.s32 %s91, 1
    %s93 = scalar_select %p90, %s91, %s92
    %p96 = pneg %p90
    %p97 = scmp.eq.s32.totalorder %s14, 5
    %p98 = por %p96, %p97
    %p99 = scmp.ne.s32.totalorder %s91, %s94
    %p100 = scmp.eq.s32.totalorder %s14, 0
    %p101 = por %p99, %p100
    %p102 = scmp.ne.s32.totalorder %s91, %s94
    %p103 = scmp.eq.s32.totalorder %s19, 5
    %p104 = por %p102, %p103
    %p105 = scmp.ne.s32.totalorder %s94, %s95
    %p106 = scmp.eq.s32.totalorder %s19, 0
    %p107 = por %p105, %p106
    %p108 = scmp.ne.s32.totalorder %s94, %s95
    %p109 = scmp.eq.s32.totalorder %s20, 5
    %p110 = por %p108, %p109
    %p112 = scmp.ne.s32.totalorder %s95, %s111
    %p113 = scmp.eq.s32.totalorder %s20, 0
    %p114 = por %p112, %p113
    %s115 = smul.u32 %s22, 3
    %s116 = sadd.s32 %s115, %s23
    %s117 = sadd.s32 %s116, 1
    %s118 = smul.u32 %s36, 3
    %s119 = sadd.s32 %s118, %s32
    %s120 = sadd.s32 %s119, 1
    %s121 = ssub.s32 %s21, %s40
    %s122 = ssub.s32 %s117, %s120
    %s123 = sor.u32 %s121, %s122
    %p124 = scmp.eq.s32.totalorder %s123, 0
    %s126 = sadd.s32 %s125, 1
    %s127 = scalar_select %p124, %s125, %s126
    %p130 = pneg %p124
    %p131 = scmp.eq.s32.totalorder %s14, 5
    %p132 = por %p130, %p131
    %p133 = scmp.ne.s32.totalorder %s125, %s128
    %p134 = scmp.eq.s32.totalorder %s14, 0
    %p135 = por %p133, %p134
    %p136 = scmp.ne.s32.totalorder %s125, %s128
    %p137 = scmp.eq.s32.totalorder %s19, 5
    %p138 = por %p136, %p137
    %p139 = scmp.ne.s32.totalorder %s128, %s129
    %p140 = scmp.eq.s32.totalorder %s19, 0
    %p141 = por %p139, %p140
    %p142 = scmp.ne.s32.totalorder %s128, %s129
    %p143 = scmp.eq.s32.totalorder %s20, 5
    %p144 = por %p142, %p143
    %p146 = scmp.ne.s32.totalorder %s129, %s145
    %p147 = scmp.eq.s32.totalorder %s20, 0
    %p148 = por %p146, %p147
    %s150 = sadd.s32 %s149, 1
    %p153 = scmp.eq.s32.totalorder %s14, 5
    %p154 = scmp.ne.s32.totalorder %s149, %s151
    %p155 = scmp.eq.s32.totalorder %s14, 0
    %p156 = por %p154, %p155
    %p157 = scmp.ne.s32.totalorder %s149, %s151
    %p158 = scmp.eq.s32.totalorder %s19, 5
    %p159 = por %p157, %p158
    %p160 = scmp.ne.s32.totalorder %s151, %s152
    %p161 = scmp.eq.s32.totalorder %s19, 0
    %p162 = por %p160, %p161
    %p163 = scmp.ne.s32.totalorder %s151, %s152
    %p164 = scmp.eq.s32.totalorder %s20, 5
    %p165 = por %p163, %p164
    %p167 = scmp.ne.s32.totalorder %s152, %s166
    %p168 = scmp.eq.s32.totalorder %s20, 0
    %p169 = por %p167, %p168
    %s170 = smul.u32 %s22, 3
    %s171 = sadd.s32 %s170, %s23
    %s172 = smul.u32 %s36, 3
    %s173 = sadd.s32 %s172, %s32
    %s174 = ssub.s32 %s21, %s40
    %s175 = ssub.s32 %s171, %s173
    %s176 = sor.u32 %s174, %s175
    %p177 = scmp.eq.s32.totalorder %s176, 0
    %s179 = sadd.s32 %s178, 1
    %s180 = scalar_select %p177, %s178, %s179
    %p183 = pneg %p177
    %p184 = scmp.eq.s32.totalorder %s14, 5
    %p185 = por %p183, %p184
    %p186 = scmp.ne.s32.totalorder %s178, %s181
    %p187 = scmp.eq.s32.totalorder %s14, 0
    %p188 = por %p186, %p187
    %p189 = scmp.ne.s32.totalorder %s178, %s181
    %p190 = scmp.eq.s32.totalorder %s19, 5
    %p191 = por %p189, %p190
    %p192 = scmp.ne.s32.totalorder %s181, %s182
    %p193 = scmp.eq.s32.totalorder %s19, 0
    %p194 = por %p192, %p193
    %p195 = scmp.ne.s32.totalorder %s181, %s182
    %p196 = scmp.eq.s32.totalorder %s20, 5
    %p197 = por %p195, %p196
    %p199 = scmp.ne.s32.totalorder %s182, %s198
    %p200 = scmp.eq.s32.totalorder %s20, 0
    %p201 = por %p199, %p200
    %s202 = ssub.s32 %s21, %s40
    %s203 = ssub.s32 %s22, %s36
    %s204 = sor.u32 %s202, %s203
    %p205 = scmp.eq.s32.totalorder %s204, 0
    %s207 = sadd.s32 %s206, 1
    %s208 = scalar_select %p205, %s206, %s207
    %p211 = pneg %p205
    %p212 = scmp.eq.s32.totalorder %s14, 5
    %p213 = por %p211, %p212
    %p214 = scmp.ne.s32.totalorder %s206, %s209
    %p215 = scmp.eq.s32.totalorder %s14, 0
    %p216 = por %p214, %p215
    %p217 = scmp.ne.s32.totalorder %s206, %s209
    %p218 = scmp.eq.s32.totalorder %s19, 5
    %p219 = por %p217, %p218
    %p220 = scmp.ne.s32.totalorder %s209, %s210
    %p221 = scmp.eq.s32.totalorder %s19, 0
    %p222 = por %p220, %p221
    %p223 = scmp.ne.s32.totalorder %s209, %s210
    %p224 = scmp.eq.s32.totalorder %s20, 5
    %p225 = por %p223, %p224
    %p227 = scmp.ne.s32.totalorder %s210, %s226
    %p228 = scmp.eq.s32.totalorder %s20, 0
    %p229 = por %p227, %p228
    %p230 = scmp.le.s32.totalorder 1, %s14
    %p231 = scmp.lt.s32.totalorder %s14, 7
    %p232 = pnand %p230, %p231
    %p233 = pneg %p232
    // Predicated region
    $region9: #{tpu_custom_call.1} parent=5 // pred_check
      _
    $region10: #{tpu_custom_call.1} parent=5 // pred_check_branch
      %235 = sbr.rel (%p232) target = $region12
    $region11: #{tpu_custom_call.1} parent=5 // pred_region
      %s236 = ssub.s32 %s14, 1
      // Predicated region
      $region13: #{tpu_custom_call.1} parent=11 // pred_check
        %p237 = pneg %p54
      $region14: #{tpu_custom_call.1} parent=11 // pred_check_branch
        %239 = sbr.rel (%p237) target = $region16
      $region15: #{tpu_custom_call.1} parent=11 // pred_region
        _
      $region16: #{tpu_custom_call.1} parent=11 // pred_fallthru
        _
      // Predicated region
      $region17: #{tpu_custom_call.1} parent=11 // pred_check
        %p240 = pneg %p75
      $region18: #{tpu_custom_call.1} parent=11 // pred_check_branch
        %242 = sbr.rel (%p240) target = $region20
      $region19: #{tpu_custom_call.1} parent=11 // pred_region
        _
      $region20: #{tpu_custom_call.1} parent=11 // pred_fallthru
        _
      // Predicated region
      $region21: #{tpu_custom_call.1} parent=11 // pred_check
        %p243 = pneg %p162
      $region22: #{tpu_custom_call.1} parent=11 // pred_check_branch
        %245 = sbr.rel (%p243) target = $region24
      $region23: #{tpu_custom_call.1} parent=11 // pred_region
        _
      $region24: #{tpu_custom_call.1} parent=11 // pred_fallthru
        _
    $region12: #{tpu_custom_call.1} parent=5 // pred_fallthru
      _
    %p246 = scmp.lt.s32.totalorder %s14, 6
    // Predicated region
    $region25: #{tpu_custom_call.1} parent=5 // pred_check
      %p247 = pneg %p246
    $region26: #{tpu_custom_call.1} parent=5 // pred_check_branch
      %249 = sbr.rel (%p247) target = $region28
    $region27: #{tpu_custom_call.1} parent=5 // pred_region
      // Predicated region
      $region29: #{tpu_custom_call.1} parent=27 // pred_check
        %p250 = pneg %p101
      $region30: #{tpu_custom_call.1} parent=27 // pred_check_branch
        %252 = sbr.rel (%p250) target = $region32
      $region31: #{tpu_custom_call.1} parent=27 // pred_region
        %s253 = smul.u32 %s22, 3
        %s254 = sadd.s32 %s253, %s23
        %p255 = scmp.lt.s32.totalorder %s21, 1
        %s256 = scalar_select %p255, %s21, 1
        %p257 = scmp.lt.s32.totalorder %s254, 3
        %s258 = scalar_select %p257, %s254, 3
        %s259 = smul.addr %s256, 4
        %s260 = sadd.s32 %s258, %s259
        %s261 = smul.addr %s260, 4
        %s262 = scalar_lea.vmem %s2, %s261
        %s263 = smul.u32 %s22, 3
        %s264 = sadd.s32 %s263, %s23
      $region32: #{tpu_custom_call.1} parent=27 // pred_fallthru
        _
      // Predicated region
      $region33: #{tpu_custom_call.1} parent=27 // pred_check
        %p265 = pneg %p135
      $region34: #{tpu_custom_call.1} parent=27 // pred_check_branch
        %267 = sbr.rel (%p265) target = $region36
      $region35: #{tpu_custom_call.1} parent=27 // pred_region
        %s268 = smul.u32 %s22, 3
        %s269 = sadd.s32 %s268, %s23
        %s270 = sadd.s32 %s269, 1
        %p271 = scmp.lt.s32.totalorder %s21, 1
        %s272 = scalar_select %p271, %s21, 1
        %p273 = scmp.lt.s32.totalorder %s270, 3
        %s274 = scalar_select %p273, %s270, 3
        %s275 = smul.addr %s272, 4
        %s276 = sadd.s32 %s274, %s275
        %s277 = smul.addr %s276, 4
        %s278 = scalar_lea.vmem %s3, %s277
        %s279 = smul.u32 %s22, 3
        %s280 = sadd.s32 %s279, %s23
        %s281 = sadd.s32 %s280, 1
      $region36: #{tpu_custom_call.1} parent=27 // pred_fallthru
        _
    $region28: #{tpu_custom_call.1} parent=5 // pred_fallthru
      _
    %p282 = scmp.le.s32.totalorder 1, %s14
    %p283 = scmp.lt.s32.totalorder %s14, 7
    %p284 = pnand %p282, %p283
    %p285 = pneg %p284
    // Predicated region
    $region37: #{tpu_custom_call.1} parent=5 // pred_check
      _
    $region38: #{tpu_custom_call.1} parent=5 // pred_check_branch
      %287 = sbr.rel (%p284) target = $region40
    $region39: #{tpu_custom_call.1} parent=5 // pred_region
      %s288 = ssub.s32 %s14, 1
      %p289 = pneg %p54
      %p290 = pneg %p51
      %p291 = pneg %p75
      %p292 = pneg %p72
      %s293 = smul.u32 %s25, 3
      %s294 = sadd.s32 %s293, %s26
      %p295 = scmp.lt.s32.totalorder %s24, 1
      %s296 = scalar_select %p295, %s24, 1
      %p297 = scmp.lt.s32.totalorder %s294, 3
      %s298 = scalar_select %p297, %s294, 3
      %s299 = smul.addr %s296, 4
      %s300 = sadd.s32 %s298, %s299
      %s301 = smul.addr %s300, 4
      %s302 = scalar_lea.vmem %s2, %s301
      %p303 = pneg %p107
      %p304 = pneg %p104
      %s305 = smul.u32 %s25, 3
      %s306 = sadd.s32 %s305, %s26
      %s307 = sadd.s32 %s306, 1
      %p308 = scmp.lt.s32.totalorder %s24, 1
      %s309 = scalar_select %p308, %s24, 1
      %p310 = scmp.lt.s32.totalorder %s307, 3
      %s311 = scalar_select %p310, %s307, 3
      %s312 = smul.addr %s309, 4
      %s313 = sadd.s32 %s311, %s312
      %s314 = smul.addr %s313, 4
      %s315 = scalar_lea.vmem %s3, %s314
      %p316 = pneg %p141
      %p317 = pneg %p138
      %p318 = pneg %p162
      %p319 = pneg %p159
      %p320 = pneg %p194
      %p321 = pneg %p191
      %s322 = smul.u32 %s25, 3
      %s323 = sadd.s32 %s322, %s26
      %p324 = scmp.lt.s32.totalorder %s24, 1
      %s325 = scalar_select %p324, %s24, 1
      %p326 = scmp.lt.s32.totalorder %s323, 2
      %s327 = scalar_select %p326, %s323, 2
      %s328 = smul.addr %s325, 3
      %s329 = sadd.s32 %s327, %s328
      %s330 = smul.addr %s329, 8
      %s331 = scalar_lea.vmem %s5, %s330
      %p332 = pneg %p222
      %p333 = pneg %p219
      %p334 = scmp.lt.s32.totalorder %s24, 1
      %s335 = scalar_select %p334, %s24, 1
      %p336 = scmp.lt.s32.totalorder %s25, 0
      %s337 = scalar_select %p336, %s25, 0
      %s338 = sadd.s32 %s337, %s335
      %s339 = smul.addr %s338, 8
      %s340 = scalar_lea.vmem %s6, %s339
      %s341 = smul.u32 %s25, 3
      %s342 = sadd.s32 %s341, %s26
      %p343 = scmp.lt.s32.totalorder %s24, 1
      %s344 = scalar_select %p343, %s24, 1
      %p345 = scmp.lt.s32.totalorder %s342, 3
      %s346 = scalar_select %p345, %s342, 3
      %s347 = smul.addr %s344, 4
      %s348 = sadd.s32 %s346, %s347
      %s349 = smul.addr %s348, 4
      %s350 = scalar_lea.vmem %s2, %s349
      %s351 = smul.u32 %s25, 3
      %s352 = sadd.s32 %s351, %s26
      %s353 = smul.u32 %s25, 3
      %s354 = sadd.s32 %s353, %s26
      %s355 = sadd.s32 %s354, 1
      %p356 = scmp.lt.s32.totalorder %s24, 1
      %s357 = scalar_select %p356, %s24, 1
      %p358 = scmp.lt.s32.totalorder %s355, 3
      %s359 = scalar_select %p358, %s355, 3
      %s360 = smul.addr %s357, 4
      %s361 = sadd.s32 %s359, %s360
      %s362 = smul.addr %s361, 4
      %s363 = scalar_lea.vmem %s3, %s362
      %s364 = smul.u32 %s25, 3
      %s365 = sadd.s32 %s364, %s26
      %s366 = sadd.s32 %s365, 1
      %s367 = smul.u32 %s25, 3
      %s368 = sadd.s32 %s367, %s26
      %p369 = scmp.lt.s32.totalorder %s24, 1
      %s370 = scalar_select %p369, %s24, 1
      %p371 = scmp.lt.s32.totalorder %s368, 2
      %s372 = scalar_select %p371, %s368, 2
      %s373 = smul.addr %s370, 3
      %s374 = sadd.s32 %s372, %s373
      %s375 = smul.addr %s374, 8
      %s376 = scalar_lea.vmem %s5, %s375
      %s377 = smul.u32 %s25, 3
      %s378 = sadd.s32 %s377, %s26
      %p379 = scmp.lt.s32.totalorder %s24, 1
      %s380 = scalar_select %p379, %s24, 1
      %p381 = scmp.lt.s32.totalorder %s25, 0
      %s382 = scalar_select %p381, %s25, 0
      %s383 = sadd.s32 %s382, %s380
      %s384 = smul.addr %s383, 8
      %s385 = scalar_lea.vmem %s6, %s384
      %p387 = scmp.eq.s32.totalorder %s26, 0
      // Predicated region
      $region41: #{tpu_custom_call.1} parent=39 // pred_check
        %p388 = pneg %p387
      $region42: #{tpu_custom_call.1} parent=39 // pred_check_branch
        %390 = sbr.rel (%p388) target = $region44
      $region43: #{tpu_custom_call.1} parent=39 // pred_region
        %vm391 = vcmask 31744
        %392 = vst.msk [vmem:[%s385] sm:$0xff] %vm391, 0.0
      $region44: #{tpu_custom_call.1} parent=39 // pred_fallthru
        _
      %v393 = vld [vmem:[%s350] sm:$0xf]
      %v394 = vunpack.c.l.bf16 %v393
      %v395 = vld [vmem:[%s363] sm:$0xf]
      %v396 = vunpack.c.l.bf16 %v395
      %v397 = vld [vmem:[%s1] sm:$0x1]
      %v398 = vlaneseq
      %v399 = vshrl.u32 %v398, 7
      %v400 = vsub.s32 0, %v399
      %v401 = vrot.slane %v397, %v400
      %v402 = vmul.f32 %v394, %v401
      %v403 = vld [vmem:[%s1 + $0x1] sm:$0x1]
      %v404 = vlaneseq
      %v405 = vshrl.u32 %v404, 7
      %v406 = vsub.s32 0, %v405
      %v407 = vrot.slane %v403, %v406
      %v408 = vmul.f32 %v394, %v407
      %v409 = vmul.f32 %v396, %v407
      %vm412 = vcmask 1045504
      %v413 = vrot.slane %v408, 2
      %v414 = vrot.slane %v409, 2
      %v415 = vsel %vm412, %v413, %v414
      %v417 = vadd.f32 %v402, %v415
      %v418 = vld [vmem:[%s1 + $0x2] sm:$0x1]
      %v419 = vlaneseq
      %v420 = vshrl.u32 %v419, 7
      %v421 = vsub.s32 0, %v420
      %v422 = vrot.slane %v418, %v421
      %v423 = vmul.f32 %v394, %v422
      %v424 = vmul.f32 %v396, %v422
      %vm427 = vcmask 1043456
      %v428 = vrot.slane %v423, 4
      %v429 = vrot.slane %v424, 4
      %v430 = vsel %vm427, %v428, %v429
      %v432 = vadd.f32 %v417, %v430
      %s433 = sld [smem:[#allocation2]]
      %vm434 = vcmp.ge.f32.partialorder %v432, 0.0
      %v435 = vstv %s433
      %v436 = vmul.f32 %v435, %v432
      %v437 = vsel %vm434, %v432, %v436
      %v438 = vpack.c.bf16 %v437, %v437
      %v439 = vld [vmem:[%s4] sm:$0x3]
      %vm440 = vcmask 31744
      %v442 = vsel %vm440, %v438, 0
      %vm444 = vcmask 1041408
      %v446 = vsel %vm444, %v439, 0
      %448 = vmatprep.subr.bf16.mxu0 0
      %449 = vmatpush1.bf16.msra.mxu0 0
      %450 = vmatprep.subr.bf16.mxu0 0
      %451 = vmatpush1.bf16.msra.mxu0 0
      %452 = vmatprep.subr.bf16.mxu0 0
      %453 = vmatpush1.bf16.msra.mxu0 0
      %454 = vmatprep.subr.bf16.mxu0 0
      %455 = vmatpush1.bf16.msra.mxu0 0
      %456 = vmatprep.subr.bf16.mxu0 0
      %457 = vmatpush1.bf16.msra.mxu0 0
      %458 = vmatprep.subr.bf16.mxu0 0
      %459 = vmatpush1.bf16.msra.mxu0 0
      %460 = vmatprep.subr.bf16.mxu0 0
      %461 = vmatpush1.bf16.msra.mxu0 0
      %462 = vmatprep.subr.bf16.mxu0 0
      %463 = vmatpush1.bf16.msra.mxu0 %v446
      %464 = vmatprep.subr.bf16.mxu0 0
      %465 = vmatpush2.bf16.msra.mxu0 0
      %466 = vmatprep.subr.bf16.mxu0 0
      %467 = vmatpush2.bf16.msra.mxu0 0
      %468 = vmatprep.subr.bf16.mxu0 0
      %469 = vmatpush2.bf16.msra.mxu0 0
      %470 = vmatprep.subr.bf16.mxu0 0
      %471 = vmatpush2.bf16.msra.mxu0 0
      %472 = vmatprep.subr.bf16.mxu0 0
      %473 = vmatpush2.bf16.msra.mxu0 0
      %474 = vmatprep.subr.bf16.mxu0 0
      %475 = vmatpush2.bf16.msra.mxu0 0
      %476 = vmatprep.subr.bf16.mxu0 0
      %477 = vmatpush2.bf16.msra.mxu0 0
      %478 = vmatprep.subr.bf16.mxu0 0
      %479 = vmatpush2.bf16.msra.mxu0 0
      %480 = vmatprep.mubr.bf16.mxu0 0
      %481 = vmatmul.mubr.bf16.gmra.mxu0 %v442
      %v482 = vpop.f32.mrf.mxu0
      %v483 = vadd.f32 0.0, %v482
      %v484 = vpop.f32.mrf.mxu0
      %v485 = vpop.f32.mrf.mxu0
      %v486 = vpop.f32.mrf.mxu0
      %487 = vdwg.mxu0
      %vm488 = vcmask 48128
      %489 = vst.msk [vmem:[%s376] sm:$0xff] %vm488, %v483
      %s490 = smul.u32 %s25, 3
      %s491 = sadd.s32 %s490, %s26
      %p492 = scmp.eq.s32.totalorder %s491, 2
      // Predicated region
      $region45: #{tpu_custom_call.1} parent=39 // pred_check
        %p493 = pneg %p492
      $region46: #{tpu_custom_call.1} parent=39 // pred_check_branch
        %495 = sbr.rel (%p493) target = $region48
      $region47: #{tpu_custom_call.1} parent=39 // pred_region
        %v496 = vlaneseq
        %v497 = vshrl.u32 %v496, 7
        %vm498 = vcmp.lt.s32.totalorder %v497, 2
        %v499 = vsel %vm498, 1, 0
        %vm500 = vcmp.eq.s32.totalorder %v499, 1
        %v501 = vsel %vm500, %v437, 0.0
        %v502 = vld [vmem:[%s385] sm:$0x1]
        %v503 = vsel %vm440, %v501, 0.0
        %v504 = vrot.slane %v503, 4
        %v505 = vadd.f32 %v503, %v504
        %v506 = vrot.slane %v505, 2
        %v507 = vadd.f32 %v505, %v506
        %v508 = vrot.slane %v507, 1
        %v509 = vadd.f32 %v507, %v508
        %v510 = vadd.f32 %v502, %v509
        %vm511 = vcmask 24576
        %512 = vst.msk [vmem:[%s385] sm:$0x1] %vm511, %v510
        %v513 = vld [vmem:[%s385 + $0x1] sm:$0x1]
        %v514 = vmul.f32 %v501, %v501
        %v515 = vsel %vm440, %v514, 0.0
        %v516 = vrot.slane %v515, 4
        %v517 = vadd.f32 %v515, %v516
        %v518 = vrot.slane %v517, 2
        %v519 = vadd.f32 %v517, %v518
        %v520 = vrot.slane %v519, 1
        %v521 = vadd.f32 %v519, %v520
        %v522 = vadd.f32 %v513, %v521
        %523 = vst.msk [vmem:[%s385 + $0x1] sm:$0x1] %vm511, %v522
      $region48: #{tpu_custom_call.1} parent=39 // pred_fallthru
        _
      %p524 = scmp.ne.s32.totalorder %s491, 2
      // Predicated region
      $region49: #{tpu_custom_call.1} parent=39 // pred_check
        %p525 = pneg %p524
      $region50: #{tpu_custom_call.1} parent=39 // pred_check_branch
        %527 = sbr.rel (%p525) target = $region52
      $region51: #{tpu_custom_call.1} parent=39 // pred_region
        %v528 = vld [vmem:[%s385] sm:$0x1]
        %v529 = vsel %vm440, %v437, 0.0
        %v530 = vrot.slane %v529, 4
        %v531 = vadd.f32 %v529, %v530
        %v532 = vrot.slane %v531, 2
        %v533 = vadd.f32 %v531, %v532
        %v534 = vrot.slane %v533, 1
        %v535 = vadd.f32 %v533, %v534
        %v536 = vadd.f32 %v528, %v535
        %vm537 = vcmask 24576
        %538 = vst.msk [vmem:[%s385] sm:$0x1] %vm537, %v536
        %v539 = vld [vmem:[%s385 + $0x1] sm:$0x1]
        %v540 = vmul.f32 %v437, %v437
        %v541 = vsel %vm440, %v540, 0.0
        %v542 = vrot.slane %v541, 4
        %v543 = vadd.f32 %v541, %v542
        %v544 = vrot.slane %v543, 2
        %v545 = vadd.f32 %v543, %v544
        %v546 = vrot.slane %v545, 1
        %v547 = vadd.f32 %v545, %v546
        %v548 = vadd.f32 %v539, %v547
        %549 = vst.msk [vmem:[%s385 + $0x1] sm:$0x1] %vm537, %v548
      $region52: #{tpu_custom_call.1} parent=39 // pred_fallthru
        _
      %s550 = smul.u32 %s25, 3
      %s551 = sadd.s32 %s550, %s26
      %p552 = scmp.lt.s32.totalorder %s24, 1
      %s553 = scalar_select %p552, %s24, 1
      %p554 = scmp.lt.s32.totalorder %s551, 2
      %s555 = scalar_select %p554, %s551, 2
      %s556 = smul.addr %s553, 3
      %s557 = sadd.s32 %s555, %s556
      %s558 = smul.addr %s557, 8
      %s559 = scalar_lea.vmem %s5, %s558
      %p560 = scmp.lt.s32.totalorder %s24, 1
      %s561 = scalar_select %p560, %s24, 1
      %p562 = scmp.lt.s32.totalorder %s25, 0
      %s563 = scalar_select %p562, %s25, 0
      %s564 = sadd.s32 %s563, %s561
      %s565 = smul.addr %s564, 8
      %s566 = scalar_lea.vmem %s6, %s565
      // Predicated region
      $region53: #{tpu_custom_call.1} parent=39 // pred_check
        %p567 = pneg %p191
      $region54: #{tpu_custom_call.1} parent=39 // pred_check_branch
        %569 = sbr.rel (%p567) target = $region56
      $region55: #{tpu_custom_call.1} parent=39 // pred_region
        %s570 = smul.u32 %s25, 3
        %s571 = sadd.s32 %s570, %s26
      $region56: #{tpu_custom_call.1} parent=39 // pred_fallthru
        _
      // Predicated region
      $region57: #{tpu_custom_call.1} parent=39 // pred_check
        %p572 = pneg %p219
      $region58: #{tpu_custom_call.1} parent=39 // pred_check_branch
        %574 = sbr.rel (%p572) target = $region60
      $region59: #{tpu_custom_call.1} parent=39 // pred_region
        _
      $region60: #{tpu_custom_call.1} parent=39 // pred_fallthru
        _
    $region40: #{tpu_custom_call.1} parent=5 // pred_fallthru
      _
    %p575 = scmp.le.s32.totalorder 2, %s14
    // Predicated region
    $region61: #{tpu_custom_call.1} parent=5 // pred_check
      %p576 = pneg %p575
    $region62: #{tpu_custom_call.1} parent=5 // pred_check_branch
      %578 = sbr.rel (%p576) target = $region64
    $region63: #{tpu_custom_call.1} parent=5 // pred_region
      %s579 = ssub.s32 %s14, 2
      // Predicated region
      $region65: #{tpu_custom_call.1} parent=63 // pred_check
        %p580 = pneg %p197
      $region66: #{tpu_custom_call.1} parent=63 // pred_check_branch
        %582 = sbr.rel (%p580) target = $region68
      $region67: #{tpu_custom_call.1} parent=63 // pred_region
        %s583 = smul.u32 %s28, 3
        %s584 = sadd.s32 %s583, %s29
        %p585 = scmp.lt.s32.totalorder %s27, 1
        %s586 = scalar_select %p585, %s27, 1
        %p587 = scmp.lt.s32.totalorder %s584, 2
        %s588 = scalar_select %p587, %s584, 2
        %s589 = smul.addr %s586, 3
        %s590 = sadd.s32 %s588, %s589
        %s591 = smul.addr %s590, 8
        %s592 = scalar_lea.vmem %s5, %s591
      $region68: #{tpu_custom_call.1} parent=63 // pred_fallthru
        _
      // Predicated region
      $region69: #{tpu_custom_call.1} parent=63 // pred_check
        %p593 = pneg %p225
      $region70: #{tpu_custom_call.1} parent=63 // pred_check_branch
        %595 = sbr.rel (%p593) target = $region72
      $region71: #{tpu_custom_call.1} parent=63 // pred_region
        %p596 = scmp.lt.s32.totalorder %s27, 1
        %s597 = scalar_select %p596, %s27, 1
        %p598 = scmp.lt.s32.totalorder %s28, 0
        %s599 = scalar_select %p598, %s28, 0
        %s600 = sadd.s32 %s599, %s597
        %s601 = smul.addr %s600, 8
        %s602 = scalar_lea.vmem %s6, %s601
      $region72: #{tpu_custom_call.1} parent=63 // pred_fallthru
        _
    $region64: #{tpu_custom_call.1} parent=5 // pred_fallthru
      _
  $region6: #{tpu_custom_call.1} parent=0 // loop_footer
    %s18 = sadd.s32 1, %s14
  $region7: #{tpu_custom_call.1} parent=0 // loop_footer_branch
    %13 = sbr.rel target = $region3
  $region8: #{tpu_custom_call.1} parent=0 // loop_exit
    _

</llo_original>
